<compile_context>
chip_gen: v7x
topology: tpu7x:2x2x1
jax: 0.10.0
libtpu: 0.0.40
codegen_flags: <defaults>
</compile_context>

<pallas_src>
import functools

import jax
import jax.numpy as jnp
from jax.experimental import pallas as pl
from jax.experimental.pallas import tpu as pltpu


def _round_up(x, m):
    return (x + m - 1) // m * m


def _fused_mlp_kernel(*refs, compute_dtype):
    # refs = (x_ref, w0, b0, w1, b1, ..., o_ref); all feature dims pre-padded
    # to multiples of 128. x block: (tm, K0p); w_l: (K_lp, N_lp); b_l: (1, N_lp).
    x_ref = refs[0]
    o_ref = refs[-1]
    wb = refs[1:-1]
    n_layers = len(wb) // 2

    h = x_ref[...].astype(jnp.float32)
    for l in range(n_layers):  # unrolled at trace time; activation stays in vregs
        w = wb[2 * l][...]
        b = wb[2 * l + 1][...]
        y = jnp.dot(h.astype(compute_dtype), w.astype(compute_dtype),
                    preferred_element_type=jnp.float32)
        # bias + ReLU in f32 (cheap VPU work, hides under the MXU slot)
        h = jnp.maximum(y + b.astype(jnp.float32), 0.0)
    o_ref[...] = h.astype(o_ref.dtype)


def init_fcnets_params(nlist, key):
    """Parameter init matching nn.Linear shapes.

    PyTorch stores weight as (out_features, in_features); we keep it transposed
    as (in_features, out_features) so the hot path is x @ W + b on the MXU.
    """
    params = []
    for n in range(len(nlist) - 1):
        fan_in, fan_out = nlist[n], nlist[n + 1]
        key, kw, kb = jax.random.split(key, 3)
        bound = 1.0 / (fan_in ** 0.5)
        w = jax.random.uniform(kw, (fan_in, fan_out), jnp.float32, -bound, bound)
        b = jax.random.uniform(kb, (fan_out,), jnp.float32, -bound, bound)
        params.append((w, b))
    return params


def pad_fcnets_params(params):
    """Zero-pad every weight/bias so feature dims are multiples of 128.

    Done ONCE at init time (not per forward call). Returns
    (padded_params, logical_dims, padded_dims).
    """
    dims = [params[0][0].shape[0]] + [w.shape[1] for (w, _) in params]
    pdims = [_round_up(d, 128) for d in dims]
    padded = []
    for l, (w, b) in enumerate(params):
        kin, kout = w.shape
        wp = jnp.zeros((pdims[l], pdims[l + 1]), w.dtype).at[:kin, :kout].set(w)
        bp = jnp.zeros((1, pdims[l + 1]), b.dtype).at[0, :kout].set(b.reshape(-1))
        padded.append((wp, bp))
    return padded, tuple(dims), tuple(pdims)


def fcnets_forward(x, padded_params, dims, pdims, *,
                   compute_dtype=jnp.float32, tm=None):
    """Fused FCNets forward: (Linear -> ReLU) for every layer in one pallas_call."""
    M, K0 = x.shape
    assert K0 == dims[0]

    # Batch tiling: tile size multiple of 8 sublanes; mark the axis "parallel".
    if tm is None:
        tm = 128 if M >= 128 else _round_up(M, 8)
    Mp = _round_up(M, tm)

    # Pad activations to (Mp, K0_pad); padded rows/cols are zero (exact).
    xp = jnp.zeros((Mp, pdims[0]), x.dtype).at[:M, :K0].set(x)

    inputs = [xp]
    in_specs = [pl.BlockSpec((tm, pdims[0]), lambda i: (i, 0))]
    for l, (wp, bp) in enumerate(padded_params):
        kp, npad = pdims[l], pdims[l + 1]
        inputs += [wp, bp]
        in_specs += [
            pl.BlockSpec((kp, npad), lambda i: (0, 0)),  # weights resident across batch tiles
            pl.BlockSpec((1, npad), lambda i: (0, 0)),   # bias resident
        ]

    kernel = functools.partial(_fused_mlp_kernel, compute_dtype=compute_dtype)

    yp = pl.pallas_call(
        kernel,
        out_shape=jax.ShapeDtypeStruct((Mp, pdims[-1]), jnp.float32),
        grid=(Mp // tm,),
        in_specs=in_specs,
        out_specs=pl.BlockSpec((tm, pdims[-1]), lambda i: (i, 0)),
        compiler_params=pltpu.CompilerParams(
            dimension_semantics=("parallel",),
        ),
    )(*inputs)

    # Strip padding back to logical shape.
    return yp[:M, :dims[-1]]


def fcnets_reference(x, params):
    out = x
    for w, b in params:
        out = jnp.maximum(out @ w + b, 0.0)
    return out


if __name__ == "__main__":
    # Small shapes consistent with an MNIST-style MLP: nlist = [64, 32, 16]
    nlist = [64, 32, 16]
    batch = 8

    key = jax.random.PRNGKey(0)
    key, kx = jax.random.split(key)
    x = jax.random.normal(kx, (batch, nlist[0]), jnp.float32)

    params = init_fcnets_params(nlist, key)
    padded_params, dims, pdims = pad_fcnets_params(params)

    fwd = jax.jit(functools.partial(fcnets_forward, dims=dims, pdims=pdims))

    out = fwd(x, padded_params)
    out = jax.block_until_ready(out)

    ref = fcnets_reference(x, params)
    assert out.shape == (batch, nlist[-1])
    assert jnp.allclose(out, ref, atol=1e-5, rtol=1e-5)

    print("KERNEL_OK")
</pallas_src>

<mosaic_0001>
module attributes {stable_mosaic.version = 11 : i64} {
  func.func @_fused_mlp_kernel(%arg0: i32, %arg1: memref<8x128xf32, #tpu.memory_space<vmem>>, %arg2: memref<128x128xf32, #tpu.memory_space<vmem>>, %arg3: memref<1x128xf32, #tpu.memory_space<vmem>>, %arg4: memref<128x128xf32, #tpu.memory_space<vmem>>, %arg5: memref<1x128xf32, #tpu.memory_space<vmem>>, %arg6: memref<8x128xf32, #tpu.memory_space<vmem>>) attributes {dimension_semantics = [#tpu.dimension_semantics<parallel>], iteration_bounds = array<i64: 1>, scalar_prefetch = 0 : i64, scratch_operands = 0 : i64, tpu.core_type = #tpu.core_type<tc>, window_params = [{transform_indices = @transform_0, window_bounds = array<i64: 8, 128>}, {pipeline_mode = #tpu.pipeline_mode<synchronous>, transform_indices = @transform_1, window_bounds = array<i64: 128, 128>}, {pipeline_mode = #tpu.pipeline_mode<synchronous>, transform_indices = @transform_2, window_bounds = array<i64: 1, 128>}, {pipeline_mode = #tpu.pipeline_mode<synchronous>, transform_indices = @transform_3, window_bounds = array<i64: 128, 128>}, {pipeline_mode = #tpu.pipeline_mode<synchronous>, transform_indices = @transform_4, window_bounds = array<i64: 1, 128>}, {transform_indices = @transform_5, window_bounds = array<i64: 8, 128>}]} {
    %c0 = arith.constant 0 : index
    %c0_0 = arith.constant 0 : index
    %0 = vector.load %arg1[%c0, %c0_0] : memref<8x128xf32, #tpu.memory_space<vmem>>, vector<8x128xf32>
    %c0_1 = arith.constant 0 : index
    %c0_2 = arith.constant 0 : index
    %1 = vector.load %arg2[%c0_1, %c0_2] : memref<128x128xf32, #tpu.memory_space<vmem>>, vector<128x128xf32>
    %c0_3 = arith.constant 0 : index
    %c0_4 = arith.constant 0 : index
    %2 = vector.load %arg3[%c0_3, %c0_4] : memref<1x128xf32, #tpu.memory_space<vmem>>, vector<1x128xf32>
    %cst = arith.constant dense<0.000000e+00> : vector<8x128xf32>
    %3 = tpu.matmul %0, %1, %cst {dimension_numbers = #tpu.dot_dimension_numbers<[1], [0], [0], [1], [0, 0, 1, 1], [], []>} : vector<8x128xf32>, vector<128x128xf32>, vector<8x128xf32> -> vector<8x128xf32>
    %4 = vector.broadcast %2 : vector<1x128xf32> to vector<8x128xf32>
    %5 = arith.addf %3, %4 : vector<8x128xf32>
    %cst_5 = arith.constant 0.000000e+00 : f32
    %6 = vector.broadcast %cst_5 : f32 to vector<8x128xf32>
    %7 = arith.maximumf %5, %6 : vector<8x128xf32>
    %c0_6 = arith.constant 0 : index
    %c0_7 = arith.constant 0 : index
    %8 = vector.load %arg4[%c0_6, %c0_7] : memref<128x128xf32, #tpu.memory_space<vmem>>, vector<128x128xf32>
    %c0_8 = arith.constant 0 : index
    %c0_9 = arith.constant 0 : index
    %9 = vector.load %arg5[%c0_8, %c0_9] : memref<1x128xf32, #tpu.memory_space<vmem>>, vector<1x128xf32>
    %cst_10 = arith.constant dense<0.000000e+00> : vector<8x128xf32>
    %10 = tpu.matmul %7, %8, %cst_10 {dimension_numbers = #tpu.dot_dimension_numbers<[1], [0], [0], [1], [0, 0, 1, 1], [], []>} : vector<8x128xf32>, vector<128x128xf32>, vector<8x128xf32> -> vector<8x128xf32>
    %11 = vector.broadcast %9 : vector<1x128xf32> to vector<8x128xf32>
    %12 = arith.addf %10, %11 : vector<8x128xf32>
    %cst_11 = arith.constant 0.000000e+00 : f32
    %13 = vector.broadcast %cst_11 : f32 to vector<8x128xf32>
    %14 = arith.maximumf %12, %13 : vector<8x128xf32>
    %c0_12 = arith.constant 0 : index
    %c0_13 = arith.constant 0 : index
    %15 = vector.load %arg6[%c0_12, %c0_13] : memref<8x128xf32, #tpu.memory_space<vmem>>, vector<8x128xf32>
    tpu.vector_store %arg6[%c0_12, %c0_13], %14 {strides = array<i32>} : memref<8x128xf32, #tpu.memory_space<vmem>>, vector<8x128xf32>,
    return
  }
  func.func @transform_0(%arg0: i32) -> (i32, i32) {
    %c0_i32 = arith.constant 0 : i32
    %c0_i32_0 = arith.constant 0 : i32
    return %arg0, %c0_i32 : i32, i32
  }
  func.func @transform_1(%arg0: i32) -> (i32, i32) {
    %c0_i32 = arith.constant 0 : i32
    %c0_i32_0 = arith.constant 0 : i32
    %c0_i32_1 = arith.constant 0 : i32
    return %c0_i32, %c0_i32_0 : i32, i32
  }
  func.func @transform_2(%arg0: i32) -> (i32, i32) {
    %c0_i32 = arith.constant 0 : i32
    %c0_i32_0 = arith.constant 0 : i32
    %c0_i32_1 = arith.constant 0 : i32
    return %c0_i32, %c0_i32_0 : i32, i32
  }
  func.func @transform_3(%arg0: i32) -> (i32, i32) {
    %c0_i32 = arith.constant 0 : i32
    %c0_i32_0 = arith.constant 0 : i32
    %c0_i32_1 = arith.constant 0 : i32
    return %c0_i32, %c0_i32_0 : i32, i32
  }
  func.func @transform_4(%arg0: i32) -> (i32, i32) {
    %c0_i32 = arith.constant 0 : i32
    %c0_i32_0 = arith.constant 0 : i32
    %c0_i32_1 = arith.constant 0 : i32
    return %c0_i32, %c0_i32_0 : i32, i32
  }
  func.func @transform_5(%arg0: i32) -> (i32, i32) {
    %c0_i32 = arith.constant 0 : i32
    %c0_i32_0 = arith.constant 0 : i32
    return %arg0, %c0_i32 : i32, i32
  }
}

</mosaic_0001>

<llo_original>
// kernel: fcnets_forward.1
$region0: #{fcnets_forward.1}
  #allocation0 [shape = 'u32[]', space=smem, size = 0x4, offset = 0x4, fixed_abs, tag = 'smem constant byte address 0x4 - core index']
  #allocation1 [shape = 'u32[144,128]{1,0:T(1,128)}', space=vmem, size = 0x12000, scoped, tag = 'internal scratch']
  %s0 = inlined_call_operand.vmem [shape: f32[8,128], index: 0, kind: input, shape index: {}]
  %s1 = inlined_call_operand.hbm [shape: f32[128,128], index: 1, kind: input, shape index: {}]
  %s2 = inlined_call_operand.vmem [shape: f32[1,128], index: 2, kind: input, shape index: {}]
  %s3 = inlined_call_operand.hbm [shape: f32[128,128], index: 3, kind: input, shape index: {}]
  %s4 = inlined_call_operand.vmem [shape: f32[1,128], index: 4, kind: input, shape index: {}]
  %s5 = inlined_call_operand.hbm [shape: f32[8,128], index: 5, kind: output, shape index: {}]
  %s6 = sld [smem:[#allocation0]]
  $region38: #{fcnets_forward.1} parent=0
    _
  %s8 = ssub.s32 1, %s6
  %s9 = scalar_select 0, %s8, %s6
  $region1: #{fcnets_forward.1} parent=0
    #allocation2 [shape = 'u8[65536]{0}', space=vmem, size = 0x10000, scoped, tag = 'input window, operand 1, single buffered']
    #allocation3 [shape = 's32[1]{0}', space=sflag, size = 0x4, scoped, tag = 'scoped memory for fcnets_forward.1']
    #allocation4 [shape = 's32[1]{0}', space=sflag, size = 0x4, scoped, tag = 'scoped memory for fcnets_forward.1']
    #allocation5 [shape = 'u8[65536]{0}', space=vmem, size = 0x10000, scoped, tag = 'input window, operand 3, single buffered']
    #allocation6 [shape = 's32[1]{0}', space=sflag, size = 0x4, scoped, tag = 'scoped memory for fcnets_forward.1']
    #allocation7 [shape = 'u8[4096]{0}', space=vmem, size = 0x1000, scoped, tag = 'output window, operand 0, single buffered']
    %10 = vsyncpa [#allocation3], 0
    %11 = vsyncpa [#allocation6], 0
    %12 = vsyncpa [#allocation4], 0
    // Predicated region
    $region2: #{fcnets_forward.1} parent=1 // pred_check
      _
    $region3: #{fcnets_forward.1} parent=1 // pred_check_branch
      %14 = sbr.rel (0) target = $region5
    $region4: #{fcnets_forward.1} parent=1 // pred_region
      _
    $region5: #{fcnets_forward.1} parent=1 // pred_fallthru
      _
    // Predicated region
    $region6: #{fcnets_forward.1} parent=1 // pred_check
      _
    $region7: #{fcnets_forward.1} parent=1 // pred_check_branch
      %16 = sbr.rel (0) target = $region9
    $region8: #{fcnets_forward.1} parent=1 // pred_region
      %s18 = ssub.s32 2048, 2048
      %19 = vsyncadd [#allocation3], %s18
      %s20 = sshll.u32 [#allocation2], 4
      %s21 = int_to_ptr.vmem [resolvable:$true] %s20
      %26 = dma.hbm_to_vmem [thread:$0]  %s1, 2048, %s21, [#allocation3], 128, 128, 8
    $region9: #{fcnets_forward.1} parent=1 // pred_fallthru
      _
    // Predicated region
    $region10: #{fcnets_forward.1} parent=1 // pred_check
      _
    $region11: #{fcnets_forward.1} parent=1 // pred_check_branch
      %28 = sbr.rel (0) target = $region13
    $region12: #{fcnets_forward.1} parent=1 // pred_region
      _
    $region13: #{fcnets_forward.1} parent=1 // pred_fallthru
      _
    // Predicated region
    $region14: #{fcnets_forward.1} parent=1 // pred_check
      _
    $region15: #{fcnets_forward.1} parent=1 // pred_check_branch
      %30 = sbr.rel (0) target = $region17
    $region16: #{fcnets_forward.1} parent=1 // pred_region
      %s32 = ssub.s32 2048, 2048
      %33 = vsyncadd [#allocation6], %s32
      %s34 = sshll.u32 [#allocation5], 4
      %s35 = int_to_ptr.vmem [resolvable:$true] %s34
      %40 = dma.hbm_to_vmem [thread:$0]  %s3, 2048, %s35, [#allocation6], 128, 128, 8
    $region17: #{fcnets_forward.1} parent=1 // pred_fallthru
      _
    // Predicated region
    $region18: #{fcnets_forward.1} parent=1 // pred_check
      _
    $region19: #{fcnets_forward.1} parent=1 // pred_check_branch
      %42 = sbr.rel (0) target = $region21
    $region20: #{fcnets_forward.1} parent=1 // pred_region
      _
    $region21: #{fcnets_forward.1} parent=1 // pred_fallthru
      _
    // Predicated region
    $region22: #{fcnets_forward.1} parent=1 // pred_check
      _
    $region23: #{fcnets_forward.1} parent=1 // pred_check_branch
      %44 = sbr.rel (0) target = $region25
    $region24: #{fcnets_forward.1} parent=1 // pred_region
      %45 = dma.done [#allocation3], 2048
    $region25: #{fcnets_forward.1} parent=1 // pred_fallthru
      _
    // Predicated region
    $region26: #{fcnets_forward.1} parent=1 // pred_check
      _
    $region27: #{fcnets_forward.1} parent=1 // pred_check_branch
      %47 = sbr.rel (0) target = $region29
    $region28: #{fcnets_forward.1} parent=1 // pred_region
      %48 = dma.done [#allocation6], 2048
    $region29: #{fcnets_forward.1} parent=1 // pred_fallthru
      _
    %v49 = vld [vmem:[%s0] sm:$0xff]
    %v50 = vld [vmem:[#allocation2] sm:$0xff]
    %v51 = vld [vmem:[#allocation2 + $0x8] sm:$0xff]
    %v52 = vld [vmem:[#allocation2 + $0x10] sm:$0xff]
    %v53 = vld [vmem:[#allocation2 + $0x18] sm:$0xff]
    %v54 = vld [vmem:[#allocation2 + $0x20] sm:$0xff]
    %v55 = vld [vmem:[#allocation2 + $0x28] sm:$0xff]
    %v56 = vld [vmem:[#allocation2 + $0x30] sm:$0xff]
    %v57 = vld [vmem:[#allocation2 + $0x38] sm:$0xff]
    %v58 = vld [vmem:[#allocation2 + $0x40] sm:$0xff]
    %v59 = vld [vmem:[#allocation2 + $0x48] sm:$0xff]
    %v60 = vld [vmem:[#allocation2 + $0x50] sm:$0xff]
    %v61 = vld [vmem:[#allocation2 + $0x58] sm:$0xff]
    %v62 = vld [vmem:[#allocation2 + $0x60] sm:$0xff]
    %v63 = vld [vmem:[#allocation2 + $0x68] sm:$0xff]
    %v64 = vld [vmem:[#allocation2 + $0x70] sm:$0xff]
    %v65 = vld [vmem:[#allocation2 + $0x78] sm:$0xff]
    %v66 = vld [vmem:[%s2] sm:$0x1]
    %v68 = vlaneseq
    %v69 = vshrl.u32 %v68, 7
    %v70 = vsub.s32 0, %v69
    %v71 = vrot.slane %v66, %v70
    %73 = vmatprep.subr.mxu0 0.0
    %74 = vmatpush1.msra.mxu0 %v50
    %75 = vmatprep.subr.mxu0 0.0
    %76 = vmatpush1.msra.mxu0 %v51
    %77 = vmatprep.subr.mxu0 0.0
    %78 = vmatpush1.msra.mxu0 %v52
    %79 = vmatprep.subr.mxu0 0.0
    %80 = vmatpush1.msra.mxu0 %v53
    %81 = vmatprep.subr.mxu0 0.0
    %82 = vmatpush1.msra.mxu0 %v54
    %83 = vmatprep.subr.mxu0 0.0
    %84 = vmatpush1.msra.mxu0 %v55
    %85 = vmatprep.subr.mxu0 0.0
    %86 = vmatpush1.msra.mxu0 %v56
    %87 = vmatprep.subr.mxu0 0.0
    %88 = vmatpush1.msra.mxu0 %v57
    %89 = vmatprep.subr.mxu0 0.0
    %90 = vmatpush1.msra.mxu0 %v58
    %91 = vmatprep.subr.mxu0 0.0
    %92 = vmatpush1.msra.mxu0 %v59
    %93 = vmatprep.subr.mxu0 0.0
    %94 = vmatpush1.msra.mxu0 %v60
    %95 = vmatprep.subr.mxu0 0.0
    %96 = vmatpush1.msra.mxu0 %v61
    %97 = vmatprep.subr.mxu0 0.0
    %98 = vmatpush1.msra.mxu0 %v62
    %99 = vmatprep.subr.mxu0 0.0
    %100 = vmatpush1.msra.mxu0 %v63
    %101 = vmatprep.subr.mxu0 0.0
    %102 = vmatpush1.msra.mxu0 %v64
    %103 = vmatprep.subr.mxu0 0.0
    %104 = vmatpush1.msra.mxu0 %v65
    %105 = vmatprep.subr.mxu0 0.0
    %106 = vmatpush1.msra.mxu0 0.0
    %107 = vmatprep.subr.mxu0 0.0
    %108 = vmatpush1.msra.mxu0 0.0
    %109 = vmatprep.subr.mxu0 0.0
    %110 = vmatpush1.msra.mxu0 0.0
    %111 = vmatprep.subr.mxu0 0.0
    %112 = vmatpush1.msra.mxu0 0.0
    %113 = vmatprep.subr.mxu0 0.0
    %114 = vmatpush1.msra.mxu0 0.0
    %115 = vmatprep.subr.mxu0 0.0
    %116 = vmatpush1.msra.mxu0 0.0
    %117 = vmatprep.subr.mxu0 0.0
    %118 = vmatpush1.msra.mxu0 0.0
    %119 = vmatprep.subr.mxu0 0.0
    %120 = vmatpush1.msra.mxu0 0.0
    %121 = vmatprep.subr.mxu0 0.0
    %122 = vmatpush1.msra.mxu0 0.0
    %123 = vmatprep.subr.mxu0 0.0
    %124 = vmatpush1.msra.mxu0 0.0
    %125 = vmatprep.subr.mxu0 0.0
    %126 = vmatpush1.msra.mxu0 0.0
    %127 = vmatprep.subr.mxu0 0.0
    %128 = vmatpush1.msra.mxu0 0.0
    %129 = vmatprep.subr.mxu0 0.0
    %130 = vmatpush1.msra.mxu0 0.0
    %131 = vmatprep.subr.mxu0 0.0
    %132 = vmatpush1.msra.mxu0 0.0
    %133 = vmatprep.subr.mxu0 0.0
    %134 = vmatpush1.msra.mxu0 0.0
    %135 = vmatprep.subr.mxu0 0.0
    %136 = vmatpush1.msra.mxu0 0.0
    %137 = vmatprep.mubr.f32.mxu0 0.0
    %138 = vmatmul.mubr.f32.gmra.mrb[0].mxu0 %v49
    %v139 = vpop.f32.mrb[0].mxu0
    %v140 = vadd.f32 %v71, %v139
    %v141 = vpop.f32.mrb[0].mxu0
    %142 = vdwg.mxu0
    %v143 = vmax.f32 %v140, 0.0
    %v144 = vld [vmem:[#allocation5] sm:$0xff]
    %v145 = vld [vmem:[#allocation5 + $0x8] sm:$0xff]
    %v146 = vld [vmem:[#allocation5 + $0x10] sm:$0xff]
    %v147 = vld [vmem:[#allocation5 + $0x18] sm:$0xff]
    %v148 = vld [vmem:[#allocation5 + $0x20] sm:$0xff]
    %v149 = vld [vmem:[#allocation5 + $0x28] sm:$0xff]
    %v150 = vld [vmem:[#allocation5 + $0x30] sm:$0xff]
    %v151 = vld [vmem:[#allocation5 + $0x38] sm:$0xff]
    %v152 = vld [vmem:[#allocation5 + $0x40] sm:$0xff]
    %v153 = vld [vmem:[#allocation5 + $0x48] sm:$0xff]
    %v154 = vld [vmem:[#allocation5 + $0x50] sm:$0xff]
    %v155 = vld [vmem:[#allocation5 + $0x58] sm:$0xff]
    %v156 = vld [vmem:[#allocation5 + $0x60] sm:$0xff]
    %v157 = vld [vmem:[#allocation5 + $0x68] sm:$0xff]
    %v158 = vld [vmem:[#allocation5 + $0x70] sm:$0xff]
    %v159 = vld [vmem:[#allocation5 + $0x78] sm:$0xff]
    %v160 = vld [vmem:[%s4] sm:$0x1]
    %v162 = vlaneseq
    %v163 = vshrl.u32 %v162, 7
    %v164 = vsub.s32 0, %v163
    %v165 = vrot.slane %v160, %v164
    %167 = vmatprep.subr.mxu0 0.0
    %168 = vmatpush1.msra.mxu0 %v144
    %169 = vmatprep.subr.mxu0 0.0
    %170 = vmatpush1.msra.mxu0 %v145
    %171 = vmatprep.subr.mxu0 0.0
    %172 = vmatpush1.msra.mxu0 %v146
    %173 = vmatprep.subr.mxu0 0.0
    %174 = vmatpush1.msra.mxu0 %v147
    %175 = vmatprep.subr.mxu0 0.0
    %176 = vmatpush1.msra.mxu0 %v148
    %177 = vmatprep.subr.mxu0 0.0
    %178 = vmatpush1.msra.mxu0 %v149
    %179 = vmatprep.subr.mxu0 0.0
    %180 = vmatpush1.msra.mxu0 %v150
    %181 = vmatprep.subr.mxu0 0.0
    %182 = vmatpush1.msra.mxu0 %v151
    %183 = vmatprep.subr.mxu0 0.0
    %184 = vmatpush1.msra.mxu0 %v152
    %185 = vmatprep.subr.mxu0 0.0
    %186 = vmatpush1.msra.mxu0 %v153
    %187 = vmatprep.subr.mxu0 0.0
    %188 = vmatpush1.msra.mxu0 %v154
    %189 = vmatprep.subr.mxu0 0.0
    %190 = vmatpush1.msra.mxu0 %v155
    %191 = vmatprep.subr.mxu0 0.0
    %192 = vmatpush1.msra.mxu0 %v156
    %193 = vmatprep.subr.mxu0 0.0
    %194 = vmatpush1.msra.mxu0 %v157
    %195 = vmatprep.subr.mxu0 0.0
    %196 = vmatpush1.msra.mxu0 %v158
    %197 = vmatprep.subr.mxu0 0.0
    %198 = vmatpush1.msra.mxu0 %v159
    %199 = vmatprep.subr.mxu0 0.0
    %200 = vmatpush1.msra.mxu0 0.0
    %201 = vmatprep.subr.mxu0 0.0
    %202 = vmatpush1.msra.mxu0 0.0
    %203 = vmatprep.subr.mxu0 0.0
    %204 = vmatpush1.msra.mxu0 0.0
    %205 = vmatprep.subr.mxu0 0.0
    %206 = vmatpush1.msra.mxu0 0.0
    %207 = vmatprep.subr.mxu0 0.0
    %208 = vmatpush1.msra.mxu0 0.0
    %209 = vmatprep.subr.mxu0 0.0
    %210 = vmatpush1.msra.mxu0 0.0
    %211 = vmatprep.subr.mxu0 0.0
    %212 = vmatpush1.msra.mxu0 0.0
    %213 = vmatprep.subr.mxu0 0.0
    %214 = vmatpush1.msra.mxu0 0.0
    %215 = vmatprep.subr.mxu0 0.0
    %216 = vmatpush1.msra.mxu0 0.0
    %217 = vmatprep.subr.mxu0 0.0
    %218 = vmatpush1.msra.mxu0 0.0
    %219 = vmatprep.subr.mxu0 0.0
    %220 = vmatpush1.msra.mxu0 0.0
    %221 = vmatprep.subr.mxu0 0.0
    %222 = vmatpush1.msra.mxu0 0.0
    %223 = vmatprep.subr.mxu0 0.0
    %224 = vmatpush1.msra.mxu0 0.0
    %225 = vmatprep.subr.mxu0 0.0
    %226 = vmatpush1.msra.mxu0 0.0
    %227 = vmatprep.subr.mxu0 0.0
    %228 = vmatpush1.msra.mxu0 0.0
    %229 = vmatprep.subr.mxu0 0.0
    %230 = vmatpush1.msra.mxu0 0.0
    %231 = vmatprep.mubr.f32.mxu0 0.0
    %232 = vmatmul.mubr.f32.gmra.mrb[0].mxu0 %v143
    %v233 = vpop.f32.mrb[0].mxu0
    %v234 = vadd.f32 %v165, %v233
    %v235 = vpop.f32.mrb[0].mxu0
    %236 = vdwg.mxu0
    %v237 = vmax.f32 %v234, 0.0
    %238 = vst [vmem:[#allocation7] sm:$0xff] %v237
    // Predicated region
    $region30: #{fcnets_forward.1} parent=1 // pred_check
      _
    $region31: #{fcnets_forward.1} parent=1 // pred_check_branch
      %240 = sbr.rel (0) target = $region33
    $region32: #{fcnets_forward.1} parent=1 // pred_region
      %s242 = ssub.s32 128, 128
      %243 = vsyncadd [#allocation4], %s242
      %s245 = sshll.u32 [#allocation7], 4
      %s246 = int_to_ptr.vmem [resolvable:$true] %s245
      %248 = dma.vmem_to_hbm [thread:$0]  %s246, 128, %s5, [#allocation4]
    $region33: #{fcnets_forward.1} parent=1 // pred_fallthru
      _
    // Predicated region
    $region34: #{fcnets_forward.1} parent=1 // pred_check
      _
    $region35: #{fcnets_forward.1} parent=1 // pred_check_branch
      %250 = sbr.rel (0) target = $region37
    $region36: #{fcnets_forward.1} parent=1 // pred_region
      %251 = dma.done [#allocation4], 128
    $region37: #{fcnets_forward.1} parent=1 // pred_fallthru
      _
    %252 = vsyncpa [#allocation3], 1
    %253 = vsyncpa [#allocation6], 1
    %254 = vsyncpa [#allocation4], 1

</llo_original>
